<compile_context>
chip_gen: v7x
topology: tpu7x:2x2x1
jax: 0.10.0
libtpu: 0.0.40
codegen_flags: <defaults>
</compile_context>

<pallas_src>
import jax
import jax.numpy as jnp
from jax.experimental import pallas as pl
from jax.experimental.pallas import tpu as pltpu


def _sigmoid_kernel(x_ref, o_ref):
    # Elementwise sigmoid on the whole VMEM tile (VPU + EUP exp path).
    o_ref[...] = jax.nn.sigmoid(x_ref[...])


def _run_sigmoid_2d(x2d):
    """Run the single-block Pallas sigmoid on a lane-dense 2-D slab."""
    total = x2d.size
    return pl.pallas_call(
        _sigmoid_kernel,
        out_shape=jax.ShapeDtypeStruct(x2d.shape, x2d.dtype),
        in_specs=[pl.BlockSpec(memory_space=pltpu.MemorySpace.VMEM)],
        out_specs=pl.BlockSpec(memory_space=pltpu.MemorySpace.VMEM),
        # Output reuses the input buffer (elementwise, same shape/dtype).
        input_output_aliases={0: 0},
        # Let XLA fuse the producer of x into the custom-call input operand.
        compiler_params=pltpu.CompilerParams(allow_input_fusion=[True]),
        cost_estimate=pl.CostEstimate(
            flops=5 * total,                        # ~cost of sigmoid per elem
            transcendentals=total,                  # one exp per elem
            bytes_accessed=2 * total * x2d.dtype.itemsize,
        ),
    )(x2d)


def sigmoid_pallas(x):
    """Apply sigmoid to an NCHW tensor via a Pallas TPU kernel.

    x: jnp.ndarray of shape (N, C, H, W), float32.
    returns: jnp.ndarray of same shape/dtype.
    """
    orig_shape = x.shape
    total = x.size

    if total % 128 == 0:
        # Lane-dense 2-D slab. For (1, 2304, 1, 1) this is (18, 128): 2 full
        # vregs + 1 partially-masked one, unmasked lane-wide vld/vst. Pure
        # reshape (element order unchanged; sigmoid is elementwise so layout
        # is free to choose).
        x2d = x.reshape(total // 128, 128)
        out2d = _run_sigmoid_2d(x2d)
        return out2d.reshape(orig_shape)
    else:
        # Robust fallback for arbitrary sizes: pad flat data to a lane-dense
        # (cdiv(total,128), 128) slab, run, slice back. Avoids the worst-case
        # (1, N) single-sublane lane-masked layout.
        rows = pl.cdiv(total, 128)
        padded = rows * 128
        flat = x.reshape(total)
        flat = jnp.pad(flat, (0, padded - total))
        out2d = _run_sigmoid_2d(flat.reshape(rows, 128))
        return out2d.reshape(padded)[:total].reshape(orig_shape)


if __name__ == "__main__":
    key = jax.random.PRNGKey(0)
    # Shape matches the PyTorch module's input: (1, 2304, 1, 1).
    x = jax.random.normal(key, (1, 2304, 1, 1), dtype=jnp.float32)

    # Reference computed first (input buffer may be aliased/reused by the
    # Pallas call's output).
    y_ref = jax.nn.sigmoid(x)

    y = sigmoid_pallas(x)
    jax.block_until_ready(y)

    assert y.shape == x.shape
    assert jnp.allclose(y, y_ref, atol=1e-6), "mismatch vs reference sigmoid"

    print("KERNEL_OK")
</pallas_src>

<mosaic_0001>
module attributes {stable_mosaic.version = 11 : i64} {
  func.func @_sigmoid_kernel(%arg0: memref<18x128xf32, #tpu.memory_space<vmem>>, %arg1: memref<18x128xf32, #tpu.memory_space<vmem>>) attributes {dimension_semantics = [], scalar_prefetch = 0 : i64, scratch_operands = 0 : i64, tpu.core_type = #tpu.core_type<tc>} {
    %c0 = arith.constant 0 : index
    %c0_0 = arith.constant 0 : index
    %0 = vector.load %arg0[%c0, %c0_0] : memref<18x128xf32, #tpu.memory_space<vmem>>, vector<18x128xf32>
    %1 = arith.negf %0 : vector<18x128xf32>
    %2 = math.exp %1 : vector<18x128xf32>
    %cst = arith.constant 1.000000e+00 : f32
    %3 = vector.broadcast %cst : f32 to vector<18x128xf32>
    %4 = arith.addf %3, %2 : vector<18x128xf32>
    %5 = arith.divf %3, %4 : vector<18x128xf32>
    %c0_1 = arith.constant 0 : index
    %c0_2 = arith.constant 0 : index
    %6 = vector.load %arg1[%c0_1, %c0_2] : memref<18x128xf32, #tpu.memory_space<vmem>>, vector<18x128xf32>
    tpu.vector_store %arg1[%c0_1, %c0_2], %5 {strides = array<i32>} : memref<18x128xf32, #tpu.memory_space<vmem>>, vector<18x128xf32>,
    return
  }
}

</mosaic_0001>

<llo_original>
// kernel: tpu_custom_call.1
$region0: #{tpu_custom_call.1}
  #allocation0 [shape = 'u32[]', space=smem, size = 0x4, offset = 0x4, fixed_abs, tag = 'smem constant byte address 0x4 - core index']
  #allocation1 [shape = 'u32[144,128]{1,0:T(1,128)}', space=vmem, size = 0x12000, scoped, tag = 'internal scratch']
  %s0 = inlined_call_operand.hbm [shape: f32[18,128], index: 0, kind: input, shape index: {}, may-alias: {0,1}]
  %s1 = inlined_call_operand.hbm [shape: f32[18,128], index: 1, kind: output, shape index: {}, may-alias: {0,1}]
  %s2 = sld [smem:[#allocation0]]
  $region18: #{tpu_custom_call.1} parent=0
    _
  %s4 = ssub.s32 1, %s2
  %s5 = scalar_select 0, %s4, %s2
  $region1: #{tpu_custom_call.1} parent=0
    #allocation2 [shape = 'u8[12288]{0}', space=vmem, size = 0x3000, scoped, tag = 'input window, operand 0, single buffered']
    #allocation3 [shape = 's32[1]{0}', space=sflag, size = 0x4, scoped, tag = 'scoped memory for tpu_custom_call.1']
    #allocation4 [shape = 's32[1]{0}', space=sflag, size = 0x4, scoped, tag = 'scoped memory for tpu_custom_call.1']
    #allocation5 [shape = 'u8[12288]{0}', space=vmem, size = 0x3000, scoped, tag = 'output window, operand 0, single buffered']
    %6 = vsyncpa [#allocation3], 0
    %7 = vsyncpa [#allocation4], 0
    // Predicated region
    $region2: #{tpu_custom_call.1} parent=1 // pred_check
      _
    $region3: #{tpu_custom_call.1} parent=1 // pred_check_branch
      %9 = sbr.rel (0) target = $region5
    $region4: #{tpu_custom_call.1} parent=1 // pred_region
      %s11 = ssub.s32 384, 384
      %12 = vsyncadd [#allocation3], %s11
      %s13 = sshll.u32 [#allocation2], 4
      %s14 = int_to_ptr.vmem [resolvable:$true] %s13
      %19 = dma.hbm_to_vmem [thread:$0]  %s0, 384, %s14, [#allocation3], 128, 128, 8
    $region5: #{tpu_custom_call.1} parent=1 // pred_fallthru
      _
    // Predicated region
    $region6: #{tpu_custom_call.1} parent=1 // pred_check
      _
    $region7: #{tpu_custom_call.1} parent=1 // pred_check_branch
      %21 = sbr.rel (0) target = $region9
    $region8: #{tpu_custom_call.1} parent=1 // pred_region
      %22 = dma.done [#allocation3], 384
    $region9: #{tpu_custom_call.1} parent=1 // pred_fallthru
      _
    %v23 = vld [vmem:[#allocation2] sm:$0xff]
    %v24 = vld [vmem:[#allocation2 + $0x8] sm:$0xff]
    %v25 = vld [vmem:[#allocation2 + $0x10] sm:$0x3]
    %v26 = vxor.u32 %v23, 2147483648
    %v27 = vxor.u32 %v24, 2147483648
    %v28 = vxor.u32 %v25, 2147483648
    %v29 = vmul.f32 %v26, 1.442695
    %v30 = vpow.pop %v29
    %v31 = vmul.f32 %v27, 1.442695
    %v32 = vpow.pop %v31
    %v33 = vmul.f32 %v28, 1.442695
    %v34 = vpow.pop %v33
    %v35 = vadd.f32 %v30, 1.0
    %v36 = vadd.f32 %v32, 1.0
    %v37 = vadd.f32 %v34, 1.0
    %v38 = vrcp.pop %v35
    %v39 = vmul.f32 1.0, %v38
    %v40 = vrcp.pop %v36
    %v41 = vmul.f32 1.0, %v40
    %v42 = vrcp.pop %v37
    %v43 = vmul.f32 1.0, %v42
    %44 = vst [vmem:[#allocation5] sm:$0xff] %v39
    %45 = vst [vmem:[#allocation5 + $0x8] sm:$0xff] %v41
    %46 = vst [vmem:[#allocation5 + $0x10] sm:$0x3] %v43
    // Predicated region
    $region10: #{tpu_custom_call.1} parent=1 // pred_check
      _
    $region11: #{tpu_custom_call.1} parent=1 // pred_check_branch
      %48 = sbr.rel (0) target = $region13
    $region12: #{tpu_custom_call.1} parent=1 // pred_region
      %s50 = ssub.s32 384, 384
      %51 = vsyncadd [#allocation4], %s50
      %s52 = sshll.u32 [#allocation5], 4
      %s53 = int_to_ptr.vmem [resolvable:$true] %s52
      %58 = dma.vmem_to_hbm [thread:$0]  %s53, 384, %s1, [#allocation4], 128, 128, 8
    $region13: #{tpu_custom_call.1} parent=1 // pred_fallthru
      _
    // Predicated region
    $region14: #{tpu_custom_call.1} parent=1 // pred_check
      _
    $region15: #{tpu_custom_call.1} parent=1 // pred_check_branch
      %60 = sbr.rel (0) target = $region17
    $region16: #{tpu_custom_call.1} parent=1 // pred_region
      %61 = dma.done [#allocation4], 384
    $region17: #{tpu_custom_call.1} parent=1 // pred_fallthru
      _
    %62 = vsyncpa [#allocation3], 1
    %63 = vsyncpa [#allocation4], 1

</llo_original>
